<compile_context>
chip_gen: v7x
topology: tpu7x:2x2x1
jax: 0.10.0
libtpu: 0.0.40
codegen_flags: <defaults>
</compile_context>

<pallas_src>
import functools

import jax
import jax.numpy as jnp
from jax import lax
from jax.experimental import pallas as pl
from jax.experimental.pallas import tpu as pltpu

_LANES = 128
# Default lane-tile per grid step. Per-step VMEM (double-buffered) stays well
# under the scoped default on v5e/v6e/v7x; sweepable via max_tile=.
_MAX_TILE = 32768


def _round_up(n, m):
    return ((n + m - 1) // m) * m


def _binary_head(x):
    """x: (2, T) f32 lane-dense logits. Returns d, e=exp(-|d|), p1=sigmoid(d)."""
    d = x[1:2, :] - x[0:1, :]                       # (1, T)
    e = jnp.exp(-jnp.abs(d))                        # EUP, always in (0, 1]
    p1 = jnp.where(d >= 0.0, 1.0, e) / (1.0 + e)    # stable sigmoid
    return d, e, p1


def _asd_loss_kernel(x_ref, lab_ref, p1_ref, predy_ref, losspart_ref, hitpart_ref,
                     *, tile_n, n_total):
    pid = pl.program_id(0)
    x = x_ref[...].astype(jnp.float32)              # (2, T)
    d, e, p1 = _binary_head(x)

    p1_ref[...] = p1                                # class-1 probability, lane-dense
    predy = jnp.round(p1)                           # half-to-even, same as torch.round
    predy_ref[...] = predy

    lab_f = lab_ref[...].astype(jnp.float32)        # (1, T), values in {0, 1}

    # mask out the padded tail of the last tile
    col = lax.broadcasted_iota(jnp.int32, (1, tile_n), 1) + pid * tile_n
    valid_f = (col < n_total).astype(jnp.float32)

    # per-row cross-entropy: softplus(d) - label*d  (== logsumexp(x) - x[label])
    nll = (jnp.maximum(d, 0.0) + jnp.log(1.0 + e) - lab_f * d) * valid_f
    loss_part = jnp.sum(nll)
    losspart_ref[...] = jnp.full((1, _LANES), loss_part, jnp.float32)

    hit_f = (predy == lab_f).astype(jnp.float32) * valid_f
    hit_part = jnp.sum(hit_f).astype(jnp.int32)
    hitpart_ref[...] = jnp.full((1, _LANES), hit_part, jnp.int32)


def _asd_score_kernel(x_ref, p1_ref):
    x = x_ref[...].astype(jnp.float32)
    _, _, p1 = _binary_head(x)
    p1_ref[...] = p1


def _lane_dense_logits(x, n_pad):
    n = x.shape[0]
    xt = x.T                                        # (2, N): batch axis -> lanes
    if n_pad > n:
        xt = jnp.pad(xt, ((0, 0), (0, n_pad - n)))
    return xt


def asd_loss(x, labels=None, *, max_tile=_MAX_TILE):
    """Pallas equivalent of ASDLoss.forward (binary logits, C == 2)."""
    n, c = x.shape
    if c != 2:
        raise NotImplementedError("asd_loss Pallas kernel assumes binary logits (C == 2)")

    tile = min(max_tile, _round_up(n, _LANES))
    n_pad = _round_up(n, tile)
    num_tiles = n_pad // tile
    xt = _lane_dense_logits(x, n_pad)               # (2, n_pad)

    x_spec = pl.BlockSpec((2, tile), lambda i: (0, i))
    row_spec = pl.BlockSpec((1, tile), lambda i: (0, i))
    part_spec = pl.BlockSpec((1, _LANES), lambda i: (0, i))
    cparams = pltpu.CompilerParams(dimension_semantics=("parallel",))

    if labels is None:
        p1 = pl.pallas_call(
            _asd_score_kernel,
            out_shape=jax.ShapeDtypeStruct((1, n_pad), jnp.float32),
            grid_spec=pltpu.PrefetchScalarGridSpec(
                num_scalar_prefetch=0, grid=(num_tiles,),
                in_specs=[x_spec], out_specs=row_spec),
            compiler_params=cparams,
        )(xt)
        # TODO(synk): torch path returns a detached .cpu().numpy() array; we return a device array.
        return p1[0, :n]

    lab = labels.reshape(1, -1).astype(jnp.int32)
    if n_pad > n:
        lab = jnp.pad(lab, ((0, 0), (0, n_pad - n)))

    kernel = functools.partial(_asd_loss_kernel, tile_n=tile, n_total=n)
    p1, predy, loss_parts, hit_parts = pl.pallas_call(
        kernel,
        out_shape=(
            jax.ShapeDtypeStruct((1, n_pad), jnp.float32),             # p1 = softmax(x)[:, 1]
            jax.ShapeDtypeStruct((1, n_pad), jnp.float32),             # predy = round(p1)
            jax.ShapeDtypeStruct((1, num_tiles * _LANES), jnp.float32),  # per-tile sum of NLL
            jax.ShapeDtypeStruct((1, num_tiles * _LANES), jnp.int32),    # per-tile hit count
        ),
        grid_spec=pltpu.PrefetchScalarGridSpec(
            num_scalar_prefetch=0, grid=(num_tiles,),
            in_specs=[x_spec, row_spec],
            out_specs=(row_spec, row_spec, part_spec, part_spec)),
        compiler_params=cparams,
    )(xt, lab)

    p1 = p1[0, :n]
    predy = predy[0, :n]
    score = jnp.stack([1.0 - p1, p1], axis=-1)       # reconstruct full softmax [N, 2]
    loss = jnp.sum(loss_parts[0, ::_LANES]) / jnp.float32(n)
    nhits = jnp.sum(hit_parts[0, ::_LANES])
    # TODO(synk): torch returns nhits via .item() (host int); we return a device scalar.
    return loss, score, predy, nhits


def _reference(x, labels):
    """Plain-JAX reference mirroring the PyTorch semantics."""
    logp = jax.nn.log_softmax(x, axis=-1)
    nll = -jnp.take_along_axis(logp, labels.reshape(-1, 1), axis=-1).mean()
    score = jax.nn.softmax(x, axis=-1)
    predy = jnp.round(score)[:, 1]
    nhits = jnp.sum(predy == labels.astype(predy.dtype)).astype(jnp.int32)
    return nll, score, predy, nhits


if __name__ == "__main__":
    key = jax.random.PRNGKey(0)
    kx, kl, kx2, kl2 = jax.random.split(key, 4)

    # binary ASD classifier logits (small shape)
    N, C = 16, 2
    x = jax.random.normal(kx, (N, C), dtype=jnp.float32)
    labels = jax.random.randint(kl, (N,), 0, C, dtype=jnp.int32)

    # labeled path
    loss, score, predy, nhits = asd_loss(x, labels)
    jax.block_until_ready((loss, score, predy, nhits))

    # unlabeled path
    score_only = asd_loss(x, None)
    jax.block_until_ready(score_only)

    r_loss, r_score, r_predy, r_nhits = _reference(x, labels)
    assert jnp.allclose(loss, r_loss, atol=1e-5), (loss, r_loss)
    assert jnp.allclose(score, r_score, atol=1e-5)
    assert jnp.allclose(predy, r_predy)
    assert int(nhits) == int(r_nhits)
    assert jnp.allclose(score_only, r_score[:, 1], atol=1e-5)

    # multi-tile path (grid > 1, padded tail masked)
    N2 = 300
    x2 = jax.random.normal(kx2, (N2, C), dtype=jnp.float32)
    labels2 = jax.random.randint(kl2, (N2,), 0, C, dtype=jnp.int32)
    loss2, score2, predy2, nhits2 = asd_loss(x2, labels2, max_tile=128)
    jax.block_until_ready((loss2, score2, predy2, nhits2))
    r_loss2, r_score2, r_predy2, r_nhits2 = _reference(x2, labels2)
    assert jnp.allclose(loss2, r_loss2, atol=1e-5), (loss2, r_loss2)
    assert jnp.allclose(score2, r_score2, atol=1e-5)
    assert jnp.allclose(predy2, r_predy2)
    assert int(nhits2) == int(r_nhits2)

    print("KERNEL_OK")
</pallas_src>

<mosaic_0001>
module attributes {stable_mosaic.version = 11 : i64} {
  func.func @_asd_loss_kernel(%arg0: i32, %arg1: memref<2x128xf32, #tpu.memory_space<vmem>>, %arg2: memref<1x128xi32, #tpu.memory_space<vmem>>, %arg3: memref<1x128xf32, #tpu.memory_space<vmem>>, %arg4: memref<1x128xf32, #tpu.memory_space<vmem>>, %arg5: memref<1x128xf32, #tpu.memory_space<vmem>>, %arg6: memref<1x128xi32, #tpu.memory_space<vmem>>) attributes {dimension_semantics = [#tpu.dimension_semantics<parallel>], iteration_bounds = array<i64: 1>, scalar_prefetch = 0 : i64, scratch_operands = 0 : i64, tpu.core_type = #tpu.core_type<tc>, window_params = [{transform_indices = @transform_0, window_bounds = array<i64: 2, 128>}, {transform_indices = @transform_1, window_bounds = array<i64: 1, 128>}, {transform_indices = @transform_2, window_bounds = array<i64: 1, 128>}, {transform_indices = @transform_3, window_bounds = array<i64: 1, 128>}, {transform_indices = @transform_4, window_bounds = array<i64: 1, 128>}, {transform_indices = @transform_5, window_bounds = array<i64: 1, 128>}]} {
    %c0 = arith.constant 0 : index
    %c0_0 = arith.constant 0 : index
    %0 = vector.load %arg1[%c0, %c0_0] : memref<2x128xf32, #tpu.memory_space<vmem>>, vector<2x128xf32>
    %1 = vector.extract_strided_slice %0 {offsets = [1, 0], sizes = [1, 128], strides = [1, 1]} : vector<2x128xf32> to vector<1x128xf32>
    %2 = vector.extract_strided_slice %0 {offsets = [0, 0], sizes = [1, 128], strides = [1, 1]} : vector<2x128xf32> to vector<1x128xf32>
    %3 = arith.subf %1, %2 : vector<1x128xf32>
    %4 = math.absf %3 : vector<1x128xf32>
    %cst = arith.constant 0.000000e+00 : f32
    %5 = vector.broadcast %cst : f32 to vector<1x128xf32>
    %6 = arith.subf %5, %4 : vector<1x128xf32>
    %7 = math.exp %6 : vector<1x128xf32>
    %cst_1 = arith.constant 0.000000e+00 : f32
    %8 = vector.broadcast %cst_1 : f32 to vector<1x128xf32>
    %9 = arith.cmpf oge, %3, %8 : vector<1x128xf32>
    %cst_2 = arith.constant 1.000000e+00 : f32
    %10 = vector.broadcast %cst_2 : f32 to vector<1x128xf32>
    %11 = arith.select %9, %10, %7 : vector<1x128xi1>, vector<1x128xf32>
    %cst_3 = arith.constant 1.000000e+00 : f32
    %12 = vector.broadcast %cst_3 : f32 to vector<1x128xf32>
    %13 = arith.addf %12, %7 : vector<1x128xf32>
    %14 = arith.divf %11, %13 : vector<1x128xf32>
    %c0_4 = arith.constant 0 : index
    %c0_5 = arith.constant 0 : index
    %15 = vector.load %arg3[%c0_4, %c0_5] : memref<1x128xf32, #tpu.memory_space<vmem>>, vector<1x128xf32>
    tpu.vector_store %arg3[%c0_4, %c0_5], %14 {strides = array<i32>} : memref<1x128xf32, #tpu.memory_space<vmem>>, vector<1x128xf32>,
    %16 = math.roundeven %14 : vector<1x128xf32>
    %c0_6 = arith.constant 0 : index
    %c0_7 = arith.constant 0 : index
    %17 = vector.load %arg4[%c0_6, %c0_7] : memref<1x128xf32, #tpu.memory_space<vmem>>, vector<1x128xf32>
    tpu.vector_store %arg4[%c0_6, %c0_7], %16 {strides = array<i32>} : memref<1x128xf32, #tpu.memory_space<vmem>>, vector<1x128xf32>,
    %c0_8 = arith.constant 0 : index
    %c0_9 = arith.constant 0 : index
    %18 = vector.load %arg2[%c0_8, %c0_9] : memref<1x128xi32, #tpu.memory_space<vmem>>, vector<1x128xi32>
    %19 = arith.sitofp %18 : vector<1x128xi32> to vector<1x128xf32>
    %20 = tpu.iota {dimensions = array<i32: 1>} : vector<1x128xi32>
    %c128_i32 = arith.constant 128 : i32
    %21 = arith.muli %arg0, %c128_i32 : i32
    %22 = vector.broadcast %21 : i32 to vector<1x128xi32>
    %23 = arith.addi %20, %22 : vector<1x128xi32>
    %c16_i32 = arith.constant 16 : i32
    %24 = vector.broadcast %c16_i32 : i32 to vector<1x128xi32>
    %25 = arith.cmpi slt, %23, %24 : vector<1x128xi32>
    %26 = arith.extui %25 : vector<1x128xi1> to vector<1x128xi32>
    %27 = arith.sitofp %26 : vector<1x128xi32> to vector<1x128xf32>
    %cst_10 = arith.constant 0.000000e+00 : f32
    %28 = vector.broadcast %cst_10 : f32 to vector<1x128xf32>
    %29 = arith.maximumf %3, %28 : vector<1x128xf32>
    %cst_11 = arith.constant 1.000000e+00 : f32
    %30 = vector.broadcast %cst_11 : f32 to vector<1x128xf32>
    %31 = arith.addf %30, %7 : vector<1x128xf32>
    %32 = math.log %31 : vector<1x128xf32>
    %33 = arith.addf %29, %32 : vector<1x128xf32>
    %34 = arith.mulf %19, %3 : vector<1x128xf32>
    %35 = arith.subf %33, %34 : vector<1x128xf32>
    %36 = arith.mulf %35, %27 : vector<1x128xf32>
    %37 = vector.shape_cast %36 : vector<1x128xf32> to vector<1x1x128xf32>
    %cst_12 = arith.constant dense<0.000000e+00> : vector<1xf32>
    %38 = vector.multi_reduction <add>, %37, %cst_12 [1, 2] : vector<1x1x128xf32> to vector<1xf32>
    %39 = vector.shape_cast %38 : vector<1xf32> to vector<1x1x1xf32>
    %40 = vector.extract %39[0, 0, 0] : f32 from vector<1x1x1xf32>
    %41 = vector.broadcast %40 : f32 to vector<1x128xf32>
    %c0_13 = arith.constant 0 : index
    %c0_14 = arith.constant 0 : index
    %42 = vector.load %arg5[%c0_13, %c0_14] : memref<1x128xf32, #tpu.memory_space<vmem>>, vector<1x128xf32>
    tpu.vector_store %arg5[%c0_13, %c0_14], %41 {strides = array<i32>} : memref<1x128xf32, #tpu.memory_space<vmem>>, vector<1x128xf32>,
    %43 = arith.cmpf oeq, %16, %19 : vector<1x128xf32>
    %44 = arith.extui %43 : vector<1x128xi1> to vector<1x128xi32>
    %45 = arith.sitofp %44 : vector<1x128xi32> to vector<1x128xf32>
    %46 = arith.mulf %45, %27 : vector<1x128xf32>
    %47 = vector.shape_cast %46 : vector<1x128xf32> to vector<1x1x128xf32>
    %cst_15 = arith.constant dense<0.000000e+00> : vector<1xf32>
    %48 = vector.multi_reduction <add>, %47, %cst_15 [1, 2] : vector<1x1x128xf32> to vector<1xf32>
    %49 = vector.shape_cast %48 : vector<1xf32> to vector<1x1x1xf32>
    %50 = vector.extract %49[0, 0, 0] : f32 from vector<1x1x1xf32>
    %51 = arith.fptosi %50 : f32 to i32
    %52 = vector.broadcast %51 : i32 to vector<1x128xi32>
    %c0_16 = arith.constant 0 : index
    %c0_17 = arith.constant 0 : index
    %53 = vector.load %arg6[%c0_16, %c0_17] : memref<1x128xi32, #tpu.memory_space<vmem>>, vector<1x128xi32>
    tpu.vector_store %arg6[%c0_16, %c0_17], %52 {strides = array<i32>} : memref<1x128xi32, #tpu.memory_space<vmem>>, vector<1x128xi32>,
    return
  }
  func.func @transform_0(%arg0: i32) -> (i32, i32) {
    %c0_i32 = arith.constant 0 : i32
    %c0_i32_0 = arith.constant 0 : i32
    return %c0_i32, %arg0 : i32, i32
  }
  func.func @transform_1(%arg0: i32) -> (i32, i32) {
    %c0_i32 = arith.constant 0 : i32
    %c0_i32_0 = arith.constant 0 : i32
    return %c0_i32, %arg0 : i32, i32
  }
  func.func @transform_2(%arg0: i32) -> (i32, i32) {
    %c0_i32 = arith.constant 0 : i32
    %c0_i32_0 = arith.constant 0 : i32
    return %c0_i32, %arg0 : i32, i32
  }
  func.func @transform_3(%arg0: i32) -> (i32, i32) {
    %c0_i32 = arith.constant 0 : i32
    %c0_i32_0 = arith.constant 0 : i32
    return %c0_i32, %arg0 : i32, i32
  }
  func.func @transform_4(%arg0: i32) -> (i32, i32) {
    %c0_i32 = arith.constant 0 : i32
    %c0_i32_0 = arith.constant 0 : i32
    return %c0_i32, %arg0 : i32, i32
  }
  func.func @transform_5(%arg0: i32) -> (i32, i32) {
    %c0_i32 = arith.constant 0 : i32
    %c0_i32_0 = arith.constant 0 : i32
    return %c0_i32, %arg0 : i32, i32
  }
}

</mosaic_0001>

<llo_original>
// kernel: tpu_custom_call.1
$region0: #{tpu_custom_call.1}
  #allocation0 [shape = 'u32[]', space=smem, size = 0x4, offset = 0x4, fixed_abs, tag = 'smem constant byte address 0x4 - core index']
  #allocation1 [shape = 'u32[144,128]{1,0:T(1,128)}', space=vmem, size = 0x12000, scoped, tag = 'internal scratch']
  %s0 = inlined_call_operand.hbm [shape: f32[2,128], index: 0, kind: input, shape index: {}]
  %s1 = inlined_call_operand.vmem [shape: s32[1,128], index: 1, kind: input, shape index: {}]
  %s2 = inlined_call_operand.hbm [shape: f32[1,128], index: 2, kind: output, shape index: {0}]
  %s3 = inlined_call_operand.hbm [shape: f32[1,128], index: 3, kind: output, shape index: {1}]
  %s4 = inlined_call_operand.hbm [shape: f32[1,128], index: 4, kind: output, shape index: {2}]
  %s5 = inlined_call_operand.hbm [shape: s32[1,128], index: 5, kind: output, shape index: {3}]
  %6 = xla_tuple %s2, %s3, %s4, %s5
  %s7 = sld [smem:[#allocation0]]
  $region46: #{tpu_custom_call.1} parent=0
    _
  %s9 = ssub.s32 1, %s7
  %s10 = scalar_select 0, %s9, %s7
  $region1: #{tpu_custom_call.1} parent=0
    #allocation2 [shape = 'u8[1024]{0}', space=vmem, size = 0x400, scoped, tag = 'input window, operand 0, single buffered']
    #allocation3 [shape = 's32[1]{0}', space=sflag, size = 0x4, scoped, tag = 'scoped memory for tpu_custom_call.1']
    #allocation4 [shape = 's32[1]{0}', space=sflag, size = 0x4, scoped, tag = 'scoped memory for tpu_custom_call.1']
    #allocation5 [shape = 'u8[512]{0}', space=vmem, size = 0x400, scoped, tag = 'output window, operand 0, single buffered']
    #allocation6 [shape = 'u8[512]{0}', space=vmem, size = 0x400, scoped, tag = 'output window, operand 1, single buffered']
    #allocation7 [shape = 's32[1]{0}', space=sflag, size = 0x4, scoped, tag = 'scoped memory for tpu_custom_call.1']
    #allocation8 [shape = 'u8[512]{0}', space=vmem, size = 0x400, scoped, tag = 'output window, operand 2, single buffered']
    #allocation9 [shape = 'u8[512]{0}', space=vmem, size = 0x400, scoped, tag = 'output window, operand 3, single buffered']
    #allocation10 [shape = 's32[1]{0}', space=sflag, size = 0x4, scoped, tag = 'scoped memory for tpu_custom_call.1']
    %11 = vsyncpa [#allocation3], 0
    %12 = vsyncpa [#allocation4], 0
    %13 = vsyncpa [#allocation7], 0
    %14 = vsyncpa [#allocation10], 0
    // Predicated region
    $region2: #{tpu_custom_call.1} parent=1 // pred_check
      _
    $region3: #{tpu_custom_call.1} parent=1 // pred_check_branch
      %16 = sbr.rel (0) target = $region5
    $region4: #{tpu_custom_call.1} parent=1 // pred_region
      %s18 = ssub.s32 32, 32
      %19 = vsyncadd [#allocation3], %s18
      %s21 = sshll.u32 [#allocation2], 4
      %s22 = int_to_ptr.vmem [resolvable:$true] %s21
      %24 = dma.hbm_to_vmem [thread:$0]  %s0, 32, %s22, [#allocation3]
    $region5: #{tpu_custom_call.1} parent=1 // pred_fallthru
      _
    // Predicated region
    $region6: #{tpu_custom_call.1} parent=1 // pred_check
      _
    $region7: #{tpu_custom_call.1} parent=1 // pred_check_branch
      %26 = sbr.rel (0) target = $region9
    $region8: #{tpu_custom_call.1} parent=1 // pred_region
      _
    $region9: #{tpu_custom_call.1} parent=1 // pred_fallthru
      _
    // Predicated region
    $region10: #{tpu_custom_call.1} parent=1 // pred_check
      _
    $region11: #{tpu_custom_call.1} parent=1 // pred_check_branch
      %28 = sbr.rel (0) target = $region13
    $region12: #{tpu_custom_call.1} parent=1 // pred_region
      %29 = dma.done [#allocation3], 32
    $region13: #{tpu_custom_call.1} parent=1 // pred_fallthru
      _
    %v30 = vld [vmem:[#allocation2] sm:$0x3]
    %v32 = vrot.slane %v30, 7
    %v34 = vsub.f32 %v30, %v32
    %v35 = vand.u32 2147483647, %v34
    %v36 = vsub.f32 0.0, %v35
    %v37 = vmul.f32 %v36, 1.442695
    %v38 = vpow.pop %v37
    %vm39 = vcmp.ge.f32.partialorder %v34, 0.0
    %v40 = vsel %vm39, 1.0, %v38
    %v41 = vadd.f32 %v38, 1.0
    %v42 = vrcp.pop %v41
    %v43 = vmul.f32 %v40, %v42
    %44 = vst [vmem:[#allocation5 - $0x1] sm:$0x2] %v43
    %v45 = vround.ne.pseudo %v43
    %46 = vst [vmem:[#allocation6 - $0x1] sm:$0x2] %v45
    %v47 = vld [vmem:[%s1] sm:$0x1]
    %v48 = vcvt.s32.f32 %v47
    %v49 = vlaneseq
    %v50 = vand.u32 %v49, 127
    %s51 = smul.u32 0, 128
    %v52 = vstv %s51
    %v53 = vadd.s32 %v50, %v52
    %vm54 = vcmp.lt.s32.totalorder %v53, 16
    %v55 = vsel %vm54, 1, 0
    %v56 = vcvt.s32.f32 %v55
    %v57 = vmax.f32 %v34, 0.0
    %v58 = vlog2.pop %v41
    %v59 = vmul.f32 %v58, 0.6931472
    %v60 = vadd.f32 %v57, %v59
    %v63 = vunpack.c.l.s4 1966171168
    %v64 = vunpack.c.0.s8 %v63
    %v65 = vlaneseq
    %v66 = vshrl.u32 %v65, 7
    %v67 = vsub.s32 %v64, %v66
    %v68 = vrot.slane %v34, %v67
    %v69 = vcombine.high %v68, %v68
    %v71 = vunpack.c.l.s4 1966171168
    %v72 = vunpack.c.0.s8 %v71
    %v73 = vlaneseq
    %v74 = vshrl.u32 %v73, 7
    %v75 = vsub.s32 %v72, %v74
    %v76 = vrot.slane %v69, %v75
    %v78 = vmul.f32 %v48, %v76
    %v80 = vlaneseq
    %v81 = vshrl.u32 %v80, 7
    %v82 = vsub.s32 0, %v81
    %v83 = vrot.slane %v78, %v82
    %v85 = vsub.f32 %v60, %v83
    %v86 = vmul.f32 %v85, %v56
    %v88 = vrot.slane %v86, 1
    %vm90 = vcmask 1040384
    %v91 = vsel %vm90, %v88, 0.0
    %92 = vadd.xlane.f32.xlu0 %v91
    %v93 = vpop.xlane.xlu0 %92
    %v94 = vrot.slane %v93, 4
    %v95 = vadd.f32 %v93, %v94
    %v96 = vrot.slane %v95, 2
    %v97 = vadd.f32 %v95, %v96
    %v98 = vrot.slane %v97, 1
    %v99 = vadd.f32 %v97, %v98
    %s100 = vtos %v99
    %v101 = vstv %s100
    %102 = vst [vmem:[#allocation8] sm:$0x1] %v101
    %v104 = vlaneseq
    %v105 = vshrl.u32 %v104, 7
    %v106 = vsub.s32 0, %v105
    %v107 = vrot.slane %v48, %v106
    %vm109 = vcmp.eq.f32.partialorder %v45, %v107
    %v110 = vsel %vm109, 1, 0
    %v111 = vcvt.s32.f32 %v110
    %v112 = vmul.f32 %v111, %v56
    %v114 = vrot.slane %v112, 1
    %v116 = vsel %vm90, %v114, 0.0
    %117 = vadd.xlane.f32.xlu0 %v116
    %v118 = vpop.xlane.xlu0 %117
    %v119 = vrot.slane %v118, 4
    %v120 = vadd.f32 %v118, %v119
    %v121 = vrot.slane %v120, 2
    %v122 = vadd.f32 %v120, %v121
    %v123 = vrot.slane %v122, 1
    %v124 = vadd.f32 %v122, %v123
    %s125 = vtos %v124
    %s126 = scvt.f32.s32.to.zero.pseudo %s125
    %v127 = vstv %s126
    %128 = vst [vmem:[#allocation9] sm:$0x1] %v127
    // Predicated region
    $region14: #{tpu_custom_call.1} parent=1 // pred_check
      _
    $region15: #{tpu_custom_call.1} parent=1 // pred_check_branch
      %130 = sbr.rel (0) target = $region17
    $region16: #{tpu_custom_call.1} parent=1 // pred_region
      %s132 = ssub.s32 16, 16
      %133 = vsyncadd [#allocation4], %s132
      %s135 = sshll.u32 [#allocation5], 4
      %s136 = int_to_ptr.vmem [resolvable:$true] %s135
      %138 = dma.vmem_to_hbm [thread:$0]  %s136, 16, %s2, [#allocation4]
    $region17: #{tpu_custom_call.1} parent=1 // pred_fallthru
      _
    // Predicated region
    $region18: #{tpu_custom_call.1} parent=1 // pred_check
      _
    $region19: #{tpu_custom_call.1} parent=1 // pred_check_branch
      %140 = sbr.rel (0) target = $region21
    $region20: #{tpu_custom_call.1} parent=1 // pred_region
      %s142 = ssub.s32 16, 16
      %143 = vsyncadd [#allocation7], %s142
      %s145 = sshll.u32 [#allocation6], 4
      %s146 = int_to_ptr.vmem [resolvable:$true] %s145
      %148 = dma.vmem_to_hbm [thread:$0]  %s146, 16, %s3, [#allocation7]
    $region21: #{tpu_custom_call.1} parent=1 // pred_fallthru
      _
    // Predicated region
    $region22: #{tpu_custom_call.1} parent=1 // pred_check
      _
    $region23: #{tpu_custom_call.1} parent=1 // pred_check_branch
      %150 = sbr.rel (0) target = $region25
    $region24: #{tpu_custom_call.1} parent=1 // pred_region
      %s152 = ssub.s32 16, 16
      %153 = vsyncadd [#allocation7], %s152
      %s155 = sshll.u32 [#allocation8], 4
      %s156 = int_to_ptr.vmem [resolvable:$true] %s155
      %158 = dma.vmem_to_hbm [thread:$0]  %s156, 16, %s4, [#allocation7]
    $region25: #{tpu_custom_call.1} parent=1 // pred_fallthru
      _
    // Predicated region
    $region26: #{tpu_custom_call.1} parent=1 // pred_check
      _
    $region27: #{tpu_custom_call.1} parent=1 // pred_check_branch
      %160 = sbr.rel (0) target = $region29
    $region28: #{tpu_custom_call.1} parent=1 // pred_region
      %s162 = ssub.s32 16, 16
      %163 = vsyncadd [#allocation10], %s162
      %s165 = sshll.u32 [#allocation9], 4
      %s166 = int_to_ptr.vmem [resolvable:$true] %s165
      %168 = dma.vmem_to_hbm [thread:$0]  %s166, 16, %s5, [#allocation10]
    $region29: #{tpu_custom_call.1} parent=1 // pred_fallthru
      _
    // Predicated region
    $region30: #{tpu_custom_call.1} parent=1 // pred_check
      _
    $region31: #{tpu_custom_call.1} parent=1 // pred_check_branch
      %170 = sbr.rel (0) target = $region33
    $region32: #{tpu_custom_call.1} parent=1 // pred_region
      %171 = dma.done [#allocation4], 16
    $region33: #{tpu_custom_call.1} parent=1 // pred_fallthru
      _
    // Predicated region
    $region34: #{tpu_custom_call.1} parent=1 // pred_check
      _
    $region35: #{tpu_custom_call.1} parent=1 // pred_check_branch
      %173 = sbr.rel (0) target = $region37
    $region36: #{tpu_custom_call.1} parent=1 // pred_region
      %174 = dma.done [#allocation7], 16
    $region37: #{tpu_custom_call.1} parent=1 // pred_fallthru
      _
    // Predicated region
    $region38: #{tpu_custom_call.1} parent=1 // pred_check
      _
    $region39: #{tpu_custom_call.1} parent=1 // pred_check_branch
      %176 = sbr.rel (0) target = $region41
    $region40: #{tpu_custom_call.1} parent=1 // pred_region
      %177 = dma.done [#allocation7], 16
    $region41: #{tpu_custom_call.1} parent=1 // pred_fallthru
      _
    // Predicated region
    $region42: #{tpu_custom_call.1} parent=1 // pred_check
      _
    $region43: #{tpu_custom_call.1} parent=1 // pred_check_branch
      %179 = sbr.rel (0) target = $region45
    $region44: #{tpu_custom_call.1} parent=1 // pred_region
      %180 = dma.done [#allocation10], 16
    $region45: #{tpu_custom_call.1} parent=1 // pred_fallthru
      _
    %181 = vsyncpa [#allocation3], 1
    %182 = vsyncpa [#allocation4], 1
    %183 = vsyncpa [#allocation7], 1
    %184 = vsyncpa [#allocation10], 1

</llo_original>
